<compile_context>
chip_gen: v6e
topology: v6e:2x2x1
jax: 0.10.0
libtpu: 0.0.40
codegen_flags: <defaults>
</compile_context>

<pallas_src>
import math
import jax
import jax.numpy as jnp
from jax.experimental import pallas as pl
from jax.experimental.pallas import tpu as pltpu

_SEQ_TILE = 1024                   # rows per block along the seq axis (multiple of 8)
_VMEM_LIMIT = 32 * 1024 * 1024     # safe on v5e/v6e/v7x; blocks here use only a few MiB


def make_sinusoidal_pe(max_len, d_model, dtype=jnp.float32):
    """Replicates the PyTorch __init__ buffer construction (parameter setup = glue, plain JAX)."""
    position = jnp.arange(max_len, dtype=jnp.float32)[:, None]
    div_term = jnp.exp(
        jnp.arange(0, d_model, 2, dtype=jnp.float32) * (-math.log(10000.0) / d_model))
    pe = jnp.zeros((max_len, d_model), dtype=jnp.float32)
    pe = pe.at[:, 0::2].set(jnp.sin(position * div_term))
    pe = pe.at[:, 1::2].set(jnp.cos(position * div_term))
    return pe.astype(dtype)


def _seq_tile(S):
    # Full-S block when small (legal: equals the full dim); otherwise a multiple-of-8 tile.
    return S if S <= _SEQ_TILE else _SEQ_TILE


# ----------------------------- standard path (the module's forward) ------------------------------

def _add_pe_kernel(x_ref, pe_ref, o_ref):
    # x_ref/o_ref: (1, tS, D)   pe_ref: (tS, D). Math in f32, explicit cast to the out dtype.
    x = x_ref[...].astype(jnp.float32)
    pe = pe_ref[...].astype(jnp.float32)
    o_ref[...] = (x + pe[None, :, :]).astype(o_ref.dtype)


def positional_encoding_forward(x, pe):
    """PositionalEncoding.forward: x + pe[:S, :].

    `pe` is the FULL (max_len, D) buffer (any float dtype; pass bf16 pe for bf16 activations to
    halve its HBM stream) -- only the seq blocks actually needed are DMA'd by the BlockSpec.
    """
    # TODO(synk): nn.Dropout(p=0.1) is treated as identity (eval/inference semantics).
    B, S, D = x.shape
    assert S <= pe.shape[0] and D == pe.shape[1]
    tS = _seq_tile(S)
    n_s = pl.cdiv(S, tS)
    return pl.pallas_call(
        _add_pe_kernel,
        # seq outermost, batch innermost: pe block index (s, 0) is constant across the B inner
        # steps, so Pallas skips its re-copy -> pe fetched once per seq tile (not once per step).
        grid=(n_s, B),
        in_specs=[pl.BlockSpec((1, tS, D), lambda s, b: (b, s, 0)),
                  pl.BlockSpec((tS, D), lambda s, b: (s, 0))],
        out_specs=pl.BlockSpec((1, tS, D), lambda s, b: (b, s, 0)),
        out_shape=jax.ShapeDtypeStruct((B, S, D), x.dtype),
        compiler_params=pltpu.CompilerParams(
            dimension_semantics=("parallel", "parallel"),
            vmem_limit_bytes=_VMEM_LIMIT),
    )(x, pe)


# ------------------------- superposition variant (kept from previous round) -----------------------

def _superposition_kernel(cos_ref, sin_ref, x_ref, pe_ref, o_ref):
    # cos_ref/sin_ref: SMEM (K,) scalar-prefetch (precomputed cos/sin of phase_shifts)
    # x_ref/o_ref: (1, tS, D) lane block k of the (B, S, K*D) array; pe_ref: (tS, D)
    k = pl.program_id(1)
    pe = pe_ref[...].astype(jnp.float32)
    # Roll done in-kernel on the XLU (idle in this elementwise kernel) instead of streaming a
    # second pre-rolled pe array from HBM.
    pe_rolled = pltpu.roll(pe, shift=1, axis=1)
    phase_pe = pe * cos_ref[k] + pe_rolled * sin_ref[k]                      # (tS, D) f32, VPU/XLU
    o_ref[...] = (x_ref[...].astype(jnp.float32) + phase_pe[None, :, :]).astype(o_ref.dtype)


def quantum_positional_encoding(x, pe, cos_p, sin_p, d_model, max_superposition_dim):
    """out[..., k*D:(k+1)*D] = x[..., k*D:(k+1)*D] + pe*cos(ph_k) + roll(pe, 1, -1)*sin(ph_k).

    cos_p/sin_p are the precomputed cos/sin of phase_shifts (hoisted module setup, K scalars).
    """
    B, S, KD = x.shape
    K, D = max_superposition_dim, d_model
    assert KD == K * D
    assert S <= pe.shape[0] and D == pe.shape[1]
    # Lane-block indexing below needs D to be a multiple of 128 (true for d_model=128).
    # TODO(synk): pad d_model up to a multiple of 128 in the wrapper if that ever changes.
    assert D % 128 == 0, "d_model must be a multiple of 128 for the lane-block fast path"

    tS = _seq_tile(S)
    n_s = pl.cdiv(S, tS)
    return pl.pallas_call(
        _superposition_kernel,
        grid_spec=pltpu.PrefetchScalarGridSpec(
            num_scalar_prefetch=2,                         # cos_p, sin_p -> SMEM
            # seq outermost, (K, B) innermost: pe block index constant for K*B consecutive steps,
            # so pe is fetched once per seq tile instead of B*K times.
            grid=(n_s, K, B),
            in_specs=[pl.BlockSpec((1, tS, D), lambda s, k, b, c, sn: (b, s, k)),
                      pl.BlockSpec((tS, D), lambda s, k, b, c, sn: (s, 0))],
            out_specs=pl.BlockSpec((1, tS, D), lambda s, k, b, c, sn: (b, s, k)),
        ),
        out_shape=jax.ShapeDtypeStruct((B, S, KD), x.dtype),
        compiler_params=pltpu.CompilerParams(
            dimension_semantics=("parallel", "parallel", "parallel"),
            vmem_limit_bytes=_VMEM_LIMIT),
    )(cos_p, sin_p, x, pe)


# --------------------------------------- pure-JAX references --------------------------------------

def reference_standard(x, pe):
    return x + pe[None, : x.shape[1], :]


def reference_superposition(x, pe, phase_shifts, d_model, K):
    B, S, _ = x.shape
    r = x.reshape(B, S, K, d_model)
    pe_s = pe[:S]
    outs = []
    for k in range(K):
        c = jnp.cos(phase_shifts[k])
        s = jnp.sin(phase_shifts[k])
        phase_pe = pe_s * c + jnp.roll(pe_s, 1, axis=-1) * s
        outs.append(r[:, :, k, :] + phase_pe[None])
    return jnp.stack(outs, axis=2).reshape(B, S, K * d_model)


if __name__ == "__main__":
    d_model = 128
    max_len = 5000
    K = 4

    # Module setup (done once): full pe buffer in f32 and a bf16 copy for bf16 activations.
    pe_f32 = make_sinusoidal_pe(max_len, d_model)
    pe_bf16 = pe_f32.astype(jnp.bfloat16)

    key = jax.random.PRNGKey(0)
    k1, k2, k3, k4 = jax.random.split(key, 4)

    # --- standard path, small shape (the module's forward) ---
    B, S = 2, 8
    x_std = jax.random.normal(k1, (B, S, d_model), dtype=jnp.float32)
    y_std = positional_encoding_forward(x_std, pe_f32)

    # --- standard path, longer sequence + bf16 input (exercises S-tiling and the bf16-pe path) ---
    B2, S2 = 4, 1024
    x_big = jax.random.normal(k2, (B2, S2, d_model), dtype=jnp.float32).astype(jnp.bfloat16)
    y_big = positional_encoding_forward(x_big, pe_bf16)

    # --- superposition variant (cos/sin of phase_shifts precomputed once = hoisted setup glue) ---
    phase_shifts = 0.1 * jax.random.normal(k3, (K,), dtype=jnp.float32)
    cos_p = jnp.cos(phase_shifts).astype(jnp.float32)
    sin_p = jnp.sin(phase_shifts).astype(jnp.float32)
    x_sup = jax.random.normal(k4, (B, S, K * d_model), dtype=jnp.float32)
    y_sup = quantum_positional_encoding(x_sup, pe_f32, cos_p, sin_p, d_model, K)

    jax.block_until_ready((y_std, y_big, y_sup))

    ref_std = reference_standard(x_std, pe_f32)
    ref_big = (x_big.astype(jnp.float32) + pe_f32[None, :S2, :]).astype(jnp.bfloat16)
    ref_sup = reference_superposition(x_sup, pe_f32, phase_shifts, d_model, K)

    assert y_std.shape == (B, S, d_model)
    assert jnp.allclose(y_std, ref_std, atol=1e-5, rtol=1e-5)
    assert y_big.shape == (B2, S2, d_model)
    assert jnp.allclose(y_big.astype(jnp.float32), ref_big.astype(jnp.float32),
                        atol=1e-2, rtol=1e-2)
    assert y_sup.shape == (B, S, K * d_model)
    assert jnp.allclose(y_sup, ref_sup, atol=1e-5, rtol=1e-5)
    print("KERNEL_OK")
</pallas_src>

<mosaic_0001>
module attributes {stable_mosaic.version = 11 : i64} {
  func.func @_add_pe_kernel(%arg0: i32, %arg1: i32, %arg2: memref<1x8x128xf32, #tpu.memory_space<vmem>>, %arg3: memref<8x128xf32, #tpu.memory_space<vmem>>, %arg4: memref<1x8x128xf32, #tpu.memory_space<vmem>>) attributes {dimension_semantics = [#tpu.dimension_semantics<parallel>, #tpu.dimension_semantics<parallel>], iteration_bounds = array<i64: 1, 2>, scalar_prefetch = 0 : i64, scratch_operands = 0 : i64, tpu.core_type = #tpu.core_type<tc>, window_params = [{transform_indices = @transform_0, window_bounds = array<i64: 1, 8, 128>}, {transform_indices = @transform_1, window_bounds = array<i64: 8, 128>}, {transform_indices = @transform_2, window_bounds = array<i64: 1, 8, 128>}]} {
    %c0 = arith.constant 0 : index
    %c0_0 = arith.constant 0 : index
    %c0_1 = arith.constant 0 : index
    %0 = vector.load %arg2[%c0, %c0_0, %c0_1] : memref<1x8x128xf32, #tpu.memory_space<vmem>>, vector<1x8x128xf32>
    %c0_2 = arith.constant 0 : index
    %c0_3 = arith.constant 0 : index
    %1 = vector.load %arg3[%c0_2, %c0_3] : memref<8x128xf32, #tpu.memory_space<vmem>>, vector<8x128xf32>
    %2 = vector.shape_cast %1 : vector<8x128xf32> to vector<1x8x128xf32>
    %3 = arith.addf %0, %2 : vector<1x8x128xf32>
    %c0_4 = arith.constant 0 : index
    %c0_5 = arith.constant 0 : index
    %c0_6 = arith.constant 0 : index
    %4 = vector.load %arg4[%c0_4, %c0_5, %c0_6] : memref<1x8x128xf32, #tpu.memory_space<vmem>>, vector<1x8x128xf32>
    tpu.vector_store %arg4[%c0_4, %c0_5, %c0_6], %3 {strides = array<i32>} : memref<1x8x128xf32, #tpu.memory_space<vmem>>, vector<1x8x128xf32>,
    return
  }
  func.func @transform_0(%arg0: i32, %arg1: i32) -> (i32, i32, i32) {
    %c0_i32 = arith.constant 0 : i32
    %c0_i32_0 = arith.constant 0 : i32
    return %arg1, %arg0, %c0_i32 : i32, i32, i32
  }
  func.func @transform_1(%arg0: i32, %arg1: i32) -> (i32, i32) {
    %c0_i32 = arith.constant 0 : i32
    %c0_i32_0 = arith.constant 0 : i32
    return %arg0, %c0_i32 : i32, i32
  }
  func.func @transform_2(%arg0: i32, %arg1: i32) -> (i32, i32, i32) {
    %c0_i32 = arith.constant 0 : i32
    %c0_i32_0 = arith.constant 0 : i32
    return %arg1, %arg0, %c0_i32 : i32, i32, i32
  }
}

</mosaic_0001>

<llo_original>
// kernel: tpu_custom_call.1
$region0: #{tpu_custom_call.1}
  #allocation0 [shape = 'u32[]', space=smem, size = 0x4, offset = 0x4, fixed_abs, tag = 'smem constant byte address 0x4 - core index']
  #allocation1 [shape = 'u32[144,128]{1,0:T(1,128)}', space=vmem, size = 0x12000, scoped, tag = 'internal scratch']
  %s0 = inlined_call_operand.hbm [shape: f32[2,8,128], index: 0, kind: input, shape index: {}]
  %s1 = inlined_call_operand.hbm [shape: f32[5000,128], index: 1, kind: input, shape index: {}]
  %s2 = inlined_call_operand.hbm [shape: f32[2,8,128], index: 2, kind: output, shape index: {}]
  %s3 = sld [smem:[#allocation0]]
  $region49: #{tpu_custom_call.1} parent=0
    _
  %s5 = ssub.s32 1, %s3
  %s6 = scalar_select 0, %s5, %s3
  $region1: #{tpu_custom_call.1} parent=0
    #allocation2 [shape = 'u8[8192]{0}', space=vmem, size = 0x2000, scoped, tag = 'input window, operand 0']
    #allocation3 [shape = 's32[2]{0}', space=sflag, size = 0x8, scoped, tag = 'scoped memory for tpu_custom_call.1']
    #allocation4 [shape = 's32[2]{0}', space=sflag, size = 0x8, scoped, tag = 'scoped memory for tpu_custom_call.1']
    #allocation5 [shape = 'u8[4096]{0}', space=vmem, size = 0x1000, scoped, tag = 'input window, operand 1, single buffered']
    #allocation6 [shape = 's32[1]{0}', space=sflag, size = 0x4, scoped, tag = 'scoped memory for tpu_custom_call.1']
    #allocation7 [shape = 'u8[8192]{0}', space=vmem, size = 0x2000, scoped, tag = 'output window, operand 0']
    %7 = vsyncpa [#allocation3], 0
    %s8 = scalar_lea.sflag [#allocation3], 1
    %9 = vsyncpa %s8, 0
    %10 = vsyncpa [#allocation6], 0
    %11 = vsyncpa [#allocation4], 0
    %s12 = scalar_lea.sflag [#allocation4], 1
    %13 = vsyncpa %s12, 0
    loop: start=0, step=1, limit=4
    $region2: #{tpu_custom_call.1} parent=1 // loop_pre_header
      _
    $region3: #{tpu_custom_call.1} parent=1 // loop_header
      %s15 = sphi 0, %s19
      %p16 = scmp.ge.s32.totalorder %s15, 4
      %s22 = sphi 0, %s34
      %s23 = sphi 0, %s30
      %s24 = sphi 0, %s22
      %s25 = sphi 0, %s23
      %s26 = sphi 0, %s24
      %s27 = sphi 0, %s25
      %s39 = sphi 0, %s41
      %s42 = sphi 0, %s39
      %s43 = sphi 0, %s42
      %s59 = sphi 0, %s43
      %s65 = sphi 0, %s67
      %s68 = sphi 0, %s65
      %s69 = sphi 0, %s68
      %s85 = sphi 0, %s69
      %s93 = sphi 0, %s95
      %s96 = sphi 0, %s93
      %s97 = sphi 0, %s96
      %s113 = sphi 0, %s97
    $region4: #{tpu_custom_call.1} parent=1 // loop_header_branch
      %18 = sbr.rel (%p16) target = $region8
    $region5: #{tpu_custom_call.1} parent=1 // loop_body
      %s20 = ssub.s32 %s15, 1
      %s21 = ssub.s32 %s15, 2
      %s28 = sadd.s32 1, %s23
      %p29 = scmp.ge.s32.totalorder %s28, 2
      %s30 = scalar_select %p29, 0, %s28
      %s31 = sadd.s32 1, %s22
      %s32 = scalar_select %p29, %s31, %s22
      %p33 = scmp.ge.s32.totalorder %s32, 1
      %s34 = scalar_select %p33, 0, %s32
      %s35 = ssub.s32 %s23, %s30
      %s36 = ssub.s32 %s22, %s34
      %s37 = sor.u32 %s35, %s36
      %p38 = scmp.eq.s32.totalorder %s37, 0
      %s40 = sadd.s32 %s39, 1
      %s41 = scalar_select %p38, %s39, %s40
      %p44 = pneg %p38
      %p45 = scmp.eq.s32.totalorder %s15, 1
      %p46 = por %p44, %p45
      %p47 = scmp.ne.s32.totalorder %s39, %s42
      %p48 = scmp.eq.s32.totalorder %s15, 0
      %p49 = por %p47, %p48
      %p50 = scmp.ne.s32.totalorder %s39, %s42
      %p51 = scmp.eq.s32.totalorder %s20, 1
      %p52 = por %p50, %p51
      %p53 = scmp.ne.s32.totalorder %s42, %s43
      %p54 = scmp.eq.s32.totalorder %s20, 0
      %p55 = por %p53, %p54
      %p56 = scmp.ne.s32.totalorder %s42, %s43
      %p57 = scmp.eq.s32.totalorder %s21, 1
      %p58 = por %p56, %p57
      %p60 = scmp.ne.s32.totalorder %s43, %s59
      %p61 = scmp.eq.s32.totalorder %s21, 0
      %p62 = por %p60, %p61
      %s63 = ssub.s32 %s22, %s34
      %p64 = scmp.eq.s32.totalorder %s63, 0
      %s66 = sadd.s32 %s65, 1
      %s67 = scalar_select %p64, %s65, %s66
      %p70 = pneg %p64
      %p71 = scmp.eq.s32.totalorder %s15, 1
      %p72 = por %p70, %p71
      %p73 = scmp.ne.s32.totalorder %s65, %s68
      %p74 = scmp.eq.s32.totalorder %s15, 0
      %p75 = por %p73, %p74
      %p76 = scmp.ne.s32.totalorder %s65, %s68
      %p77 = scmp.eq.s32.totalorder %s20, 1
      %p78 = por %p76, %p77
      %p79 = scmp.ne.s32.totalorder %s68, %s69
      %p80 = scmp.eq.s32.totalorder %s20, 0
      %p81 = por %p79, %p80
      %p82 = scmp.ne.s32.totalorder %s68, %s69
      %p83 = scmp.eq.s32.totalorder %s21, 1
      %p84 = por %p82, %p83
      %p86 = scmp.ne.s32.totalorder %s69, %s85
      %p87 = scmp.eq.s32.totalorder %s21, 0
      %p88 = por %p86, %p87
      %s89 = ssub.s32 %s23, %s30
      %s90 = ssub.s32 %s22, %s34
      %s91 = sor.u32 %s89, %s90
      %p92 = scmp.eq.s32.totalorder %s91, 0
      %s94 = sadd.s32 %s93, 1
      %s95 = scalar_select %p92, %s93, %s94
      %p98 = pneg %p92
      %p99 = scmp.eq.s32.totalorder %s15, 1
      %p100 = por %p98, %p99
      %p101 = scmp.ne.s32.totalorder %s93, %s96
      %p102 = scmp.eq.s32.totalorder %s15, 0
      %p103 = por %p101, %p102
      %p104 = scmp.ne.s32.totalorder %s93, %s96
      %p105 = scmp.eq.s32.totalorder %s20, 1
      %p106 = por %p104, %p105
      %p107 = scmp.ne.s32.totalorder %s96, %s97
      %p108 = scmp.eq.s32.totalorder %s20, 0
      %p109 = por %p107, %p108
      %p110 = scmp.ne.s32.totalorder %s96, %s97
      %p111 = scmp.eq.s32.totalorder %s21, 1
      %p112 = por %p110, %p111
      %p114 = scmp.ne.s32.totalorder %s97, %s113
      %p115 = scmp.eq.s32.totalorder %s21, 0
      %p116 = por %p114, %p115
      %p117 = scmp.le.s32.totalorder 1, %s15
      %p118 = scmp.lt.s32.totalorder %s15, 3
      %p119 = pnand %p117, %p118
      %p120 = pneg %p119
      // Predicated region
      $region9: #{tpu_custom_call.1} parent=5 // pred_check
        _
      $region10: #{tpu_custom_call.1} parent=5 // pred_check_branch
        %122 = sbr.rel (%p119) target = $region12
      $region11: #{tpu_custom_call.1} parent=5 // pred_region
        %s123 = ssub.s32 %s15, 1
        // Predicated region
        $region13: #{tpu_custom_call.1} parent=11 // pred_check
          %p124 = pneg %p81
        $region14: #{tpu_custom_call.1} parent=11 // pred_check_branch
          %126 = sbr.rel (%p124) target = $region16
        $region15: #{tpu_custom_call.1} parent=11 // pred_region
          %s128 = ssub.s32 128, 128
          %129 = vsyncadd [#allocation6], %s128
          %s130 = smul.addr %s24, 128
          %s131 = scalar_lea.hbm %s1, %s130
          %s133 = sshll.u32 [#allocation5], 4
          %s134 = int_to_ptr.vmem [resolvable:$true] %s133
          %136 = dma.hbm_to_vmem [thread:$0]  %s131, 128, %s134, [#allocation6]
        $region16: #{tpu_custom_call.1} parent=11 // pred_fallthru
          _
      $region12: #{tpu_custom_call.1} parent=5 // pred_fallthru
        _
      %p137 = scmp.lt.s32.totalorder %s15, 2
      // Predicated region
      $region17: #{tpu_custom_call.1} parent=5 // pred_check
        %p138 = pneg %p137
      $region18: #{tpu_custom_call.1} parent=5 // pred_check_branch
        %140 = sbr.rel (%p138) target = $region20
      $region19: #{tpu_custom_call.1} parent=5 // pred_region
        // Predicated region
        $region21: #{tpu_custom_call.1} parent=19 // pred_check
          %p141 = pneg %p49
        $region22: #{tpu_custom_call.1} parent=19 // pred_check_branch
          %143 = sbr.rel (%p141) target = $region24
        $region23: #{tpu_custom_call.1} parent=19 // pred_region
          %s144 = sand.u32 %s39, 1
          %s145 = scalar_lea.sflag [#allocation3], %s144
          %s146 = sand.u32 %s39, 1
          %s147 = smul.addr %s146, 8
          %s148 = scalar_lea.vmem [#allocation2], %s147
          %s150 = ssub.s32 128, 128
          %151 = vsyncadd %s145, %s150
          %s152 = sadd.s32 %s22, %s23
          %s153 = smul.addr %s152, 128
          %s154 = scalar_lea.hbm %s0, %s153
          %s156 = sshll.u32 %s148, 4
          %s157 = int_to_ptr.vmem [resolvable:$true] %s156
          %159 = dma.hbm_to_vmem [thread:$0]  %s154, 128, %s157, %s145
        $region24: #{tpu_custom_call.1} parent=19 // pred_fallthru
          _
      $region20: #{tpu_custom_call.1} parent=5 // pred_fallthru
        _
      %p160 = scmp.le.s32.totalorder 1, %s15
      %p161 = scmp.lt.s32.totalorder %s15, 3
      %p162 = pnand %p160, %p161
      %p163 = pneg %p162
      // Predicated region
      $region25: #{tpu_custom_call.1} parent=5 // pred_check
        _
      $region26: #{tpu_custom_call.1} parent=5 // pred_check_branch
        %165 = sbr.rel (%p162) target = $region28
      $region27: #{tpu_custom_call.1} parent=5 // pred_region
        %s166 = ssub.s32 %s15, 1
        %s167 = sand.u32 %s42, 1
        %s168 = scalar_lea.sflag [#allocation3], %s167
        %s169 = sand.u32 %s42, 1
        %s170 = smul.addr %s169, 8
        %s171 = scalar_lea.vmem [#allocation2], %s170
        // Predicated region
        $region29: #{tpu_custom_call.1} parent=27 // pred_check
          %p172 = pneg %p55
        $region30: #{tpu_custom_call.1} parent=27 // pred_check_branch
          %174 = sbr.rel (%p172) target = $region32
        $region31: #{tpu_custom_call.1} parent=27 // pred_region
          %175 = dma.done %s168, 128
        $region32: #{tpu_custom_call.1} parent=27 // pred_fallthru
          _
        // Predicated region
        $region33: #{tpu_custom_call.1} parent=27 // pred_check
          %p176 = pneg %p81
        $region34: #{tpu_custom_call.1} parent=27 // pred_check_branch
          %178 = sbr.rel (%p176) target = $region36
        $region35: #{tpu_custom_call.1} parent=27 // pred_region
          %179 = dma.done [#allocation6], 128
        $region36: #{tpu_custom_call.1} parent=27 // pred_fallthru
          _
        %s180 = sand.u32 %s42, 1
        %s181 = scalar_lea.sflag [#allocation3], %s180
        %s182 = sand.u32 %s42, 1
        %s183 = smul.addr %s182, 8
        %s184 = scalar_lea.vmem [#allocation2], %s183
        %p185 = pneg %p55
        %p186 = pneg %p52
        %p187 = pneg %p81
        %p188 = pneg %p78
        %p189 = pneg %p109
        %p190 = pneg %p106
        %s191 = sand.u32 %s96, 1
        %s192 = scalar_lea.sflag [#allocation4], %s191
        %s193 = sand.u32 %s96, 1
        %s194 = smul.addr %s193, 8
        %s195 = scalar_lea.vmem [#allocation7], %s194
        %v196 = vld [vmem:[%s171] sm:$0xff]
        %v197 = vld [vmem:[#allocation5] sm:$0xff]
        %v198 = vadd.f32 %v196, %v197
        %199 = vst [vmem:[%s195] sm:$0xff] %v198
        %s200 = sand.u32 %s96, 1
        %s201 = scalar_lea.sflag [#allocation4], %s200
        %s202 = sand.u32 %s96, 1
        %s203 = smul.addr %s202, 8
        %s204 = scalar_lea.vmem [#allocation7], %s203
        // Predicated region
        $region37: #{tpu_custom_call.1} parent=27 // pred_check
          %p205 = pneg %p106
        $region38: #{tpu_custom_call.1} parent=27 // pred_check_branch
          %207 = sbr.rel (%p205) target = $region40
        $region39: #{tpu_custom_call.1} parent=27 // pred_region
          %s209 = ssub.s32 128, 128
          %210 = vsyncadd %s201, %s209
          %s211 = sadd.s32 %s24, %s25
          %s212 = smul.addr %s211, 128
          %s213 = scalar_lea.hbm %s2, %s212
          %s215 = sshll.u32 %s204, 4
          %s216 = int_to_ptr.vmem [resolvable:$true] %s215
          %218 = dma.vmem_to_hbm [thread:$0]  %s216, 128, %s213, %s201
        $region40: #{tpu_custom_call.1} parent=27 // pred_fallthru
          _
      $region28: #{tpu_custom_call.1} parent=5 // pred_fallthru
        _
      %p219 = scmp.le.s32.totalorder 2, %s15
      // Predicated region
      $region41: #{tpu_custom_call.1} parent=5 // pred_check
        %p220 = pneg %p219
      $region42: #{tpu_custom_call.1} parent=5 // pred_check_branch
        %222 = sbr.rel (%p220) target = $region44
      $region43: #{tpu_custom_call.1} parent=5 // pred_region
        %s223 = ssub.s32 %s15, 2
        // Predicated region
        $region45: #{tpu_custom_call.1} parent=43 // pred_check
          %p224 = pneg %p112
        $region46: #{tpu_custom_call.1} parent=43 // pred_check_branch
          %226 = sbr.rel (%p224) target = $region48
        $region47: #{tpu_custom_call.1} parent=43 // pred_region
          %s227 = sand.u32 %s97, 1
          %s228 = scalar_lea.sflag [#allocation4], %s227
          %s229 = sand.u32 %s97, 1
          %s230 = smul.addr %s229, 8
          %s231 = scalar_lea.vmem [#allocation7], %s230
          %232 = dma.done %s228, 128
        $region48: #{tpu_custom_call.1} parent=43 // pred_fallthru
          _
      $region44: #{tpu_custom_call.1} parent=5 // pred_fallthru
        _
    $region6: #{tpu_custom_call.1} parent=1 // loop_footer
      %s19 = sadd.s32 1, %s15
    $region7: #{tpu_custom_call.1} parent=1 // loop_footer_branch
      %14 = sbr.rel target = $region3
    $region8: #{tpu_custom_call.1} parent=1 // loop_exit
      _
    %233 = vsyncpa [#allocation3], 1
    %s234 = scalar_lea.sflag [#allocation3], 1
    %235 = vsyncpa %s234, 1
    %236 = vsyncpa [#allocation6], 1
    %237 = vsyncpa [#allocation4], 1
    %s238 = scalar_lea.sflag [#allocation4], 1
    %239 = vsyncpa %s238, 1

</llo_original>
